<compile_context>
chip_gen: v7x
topology: tpu7x:2x2x1
jax: 0.10.0
libtpu: 0.0.40
codegen_flags: <defaults>
</compile_context>

<pallas_src>
import functools

import jax
import jax.numpy as jnp
from jax.experimental import pallas as pl
from jax.experimental.pallas import tpu as pltpu


def _round_up(x: int, m: int) -> int:
    return ((x + m - 1) // m) * m


def _make_fractal_kernel(num_scales: int):
    """One node tile:  o_tile = sum_s  h_s_tile @ W_fused[s]  (f32 accumulate)."""

    def kernel(*refs):
        h_refs = refs[:num_scales]        # S x (tile_n, d_in)   gathered features
        w_ref = refs[num_scales]          # (S, d_in, d_out_pad) fused weight (resident)
        o_ref = refs[num_scales + 1]      # (tile_n, d_out_pad)  lane-dense output
        acc = jnp.dot(h_refs[0][...], w_ref[0],
                      preferred_element_type=jnp.float32)
        for s in range(1, num_scales):
            acc += jnp.dot(h_refs[s][...], w_ref[s],
                           preferred_element_type=jnp.float32)
        o_ref[...] = acc.astype(o_ref.dtype)

    return kernel


def fuse_fractal_weights(frac_weights, final_weight, *, scales=(1, 2, 3),
                         dtype=jnp.bfloat16, lane=128):
    """Precompute W_fused[s] = W_{s-1}^T @ Wf_block_s, zero-padded to `lane` output cols.

    Hoist this out of the per-call path when weights are static (inference).
    Valid because the module applies NO bias/activation/dropout between the
    per-scale Linears and the final Linear (concat_type='concat').
    """
    S = len(scales)
    d_out, d_in = frac_weights[0].shape
    d_out_pad = _round_up(d_out, lane)
    # j-th (d_out, d_out) row-block of final_weight.T multiplies the j-th scale's output.
    wf_blocks = final_weight.T.reshape(S, d_out, d_out)
    w = jnp.stack(
        [frac_weights[s - 1].T.astype(jnp.float32) @ wf_blocks[j].astype(jnp.float32)
         for j, s in enumerate(scales)],
        axis=0)                                              # (S, d_in, d_out)
    if d_out_pad != d_out:
        w = jnp.pad(w, ((0, 0), (0, 0), (0, d_out_pad - d_out)))
    return w.astype(dtype)                                   # (S, d_in, d_out_pad)


def fractal_layer_forward(h, cover_mat, w_fused, *, d_out, scales=(1, 2, 3),
                          tile_n=2048, out_dtype=None):
    """
    h         : [N, input_dim]  node features
    cover_mat : [N, >=max(scales)] int32 covering matrix (graph.ndata['frac_cover_mat'])
    w_fused   : [S, input_dim, d_out_pad] fused weight from fuse_fractal_weights();
                its dtype defines the MXU compute dtype (bf16 recommended).
    returns   : [N, d_out]
    """
    N, d_in = h.shape
    S = len(scales)
    assert w_fused.shape[0] == S and w_fused.shape[1] == d_in
    d_out_pad = w_fused.shape[2]
    out_dtype = out_dtype or h.dtype
    compute_dtype = w_fused.dtype

    # Cast BEFORE the gather: halves the dominant gather + feature HBM traffic for bf16.
    h_c = h.astype(compute_dtype)

    # Node tiling; pad ragged tail with zero rows instead of asserting.
    tile_n = max(16, min(_round_up(tile_n, 16), _round_up(N, 16)))
    N_pad = _round_up(N, tile_n)

    # Per-scale row gather stays in XLA (data-dependent); each scale is its own
    # kernel input — no concatenated (N, S*d_in) slab is materialized in HBM.
    parts = []
    for s in scales:
        g = h_c[cover_mat[:, s - 1], :]
        if N_pad != N:
            g = jnp.pad(g, ((0, N_pad - N), (0, 0)))
        parts.append(g)

    grid = (N_pad // tile_n,)
    in_bytes = jnp.dtype(compute_dtype).itemsize
    out_bytes = jnp.dtype(out_dtype).itemsize
    cost = pl.CostEstimate(
        flops=2 * N_pad * S * d_in * d_out_pad,
        transcendentals=0,
        bytes_accessed=(S * N_pad * d_in * in_bytes
                        + S * d_in * d_out_pad * in_bytes
                        + N_pad * d_out_pad * out_bytes),
    )

    feat_spec = pl.BlockSpec((tile_n, d_in), lambda i: (i, 0))
    out = pl.pallas_call(
        _make_fractal_kernel(S),
        out_shape=jax.ShapeDtypeStruct((N_pad, d_out_pad), out_dtype),
        grid_spec=pltpu.PrefetchScalarGridSpec(
            num_scalar_prefetch=0,
            grid=grid,
            in_specs=[feat_spec] * S + [
                # fused weight: constant block index -> DMA'd once, stays resident
                pl.BlockSpec((S, d_in, d_out_pad), lambda i: (0, 0, 0)),
            ],
            # 128-lane output block -> unmasked full-width stores
            out_specs=pl.BlockSpec((tile_n, d_out_pad), lambda i: (i, 0)),
        ),
        compiler_params=pltpu.CompilerParams(
            dimension_semantics=("parallel",)),
        cost_estimate=cost,
    )(*parts, w_fused)

    return out[:N, :d_out]


def _reference(h, cover_mat, frac_weights, final_weight, scales=(1, 2, 3)):
    h_all = [h[cover_mat[:, s - 1], :] @ frac_weights[s - 1].T for s in scales]
    h_final = jnp.concatenate(h_all, axis=-1)
    return h_final @ final_weight.T


if __name__ == "__main__":
    key = jax.random.PRNGKey(0)
    N, d_in, d_out = 16, 32, 32
    scales = (1, 2, 3)
    S = len(scales)

    k_h, k_c, k_w, k_f = jax.random.split(key, 4)
    h = jax.random.normal(k_h, (N, d_in), dtype=jnp.float32)
    cover_mat = jax.random.randint(k_c, (N, S), 0, N, dtype=jnp.int32)

    wkeys = jax.random.split(k_w, S)
    frac_weights = [0.1 * jax.random.normal(wkeys[i], (d_out, d_in), dtype=jnp.float32)
                    for i in range(S)]
    final_weight = 0.1 * jax.random.normal(k_f, (d_out, d_out * S), dtype=jnp.float32)

    ref = _reference(h, cover_mat, frac_weights, final_weight, scales=scales)

    # --- default path: fused weight precomputed ONCE (hoisted), bf16 compute ---
    w_fused_bf16 = fuse_fractal_weights(frac_weights, final_weight,
                                        scales=scales, dtype=jnp.bfloat16)
    fwd = jax.jit(functools.partial(fractal_layer_forward,
                                    d_out=d_out, scales=scales, tile_n=2048))
    out = jax.block_until_ready(fwd(h, cover_mat, w_fused_bf16))
    assert out.shape == (N, d_out)
    assert jnp.allclose(out, ref, atol=2e-2, rtol=2e-2), "bf16 mismatch vs reference"

    # --- f32 compute path for a tight numerical check ---
    w_fused_f32 = fuse_fractal_weights(frac_weights, final_weight,
                                       scales=scales, dtype=jnp.float32)
    fwd_f32 = jax.jit(functools.partial(fractal_layer_forward,
                                        d_out=d_out, scales=scales, tile_n=2048))
    out_f32 = jax.block_until_ready(fwd_f32(h, cover_mat, w_fused_f32))
    assert out_f32.shape == (N, d_out)
    assert jnp.allclose(out_f32, ref, atol=1e-4, rtol=1e-4), "f32 mismatch vs reference"

    # --- ragged / multi-tile sanity check (exercises padding + grid > 1) ---
    N2 = 200
    k_h2, k_c2 = jax.random.split(jax.random.PRNGKey(1), 2)
    h2 = jax.random.normal(k_h2, (N2, d_in), dtype=jnp.float32)
    cover2 = jax.random.randint(k_c2, (N2, S), 0, N2, dtype=jnp.int32)
    ref2 = _reference(h2, cover2, frac_weights, final_weight, scales=scales)
    fwd2 = jax.jit(functools.partial(fractal_layer_forward,
                                     d_out=d_out, scales=scales, tile_n=64))
    out2 = jax.block_until_ready(fwd2(h2, cover2, w_fused_f32))
    assert out2.shape == (N2, d_out)
    assert jnp.allclose(out2, ref2, atol=1e-4, rtol=1e-4), "multi-tile mismatch vs reference"

    print("KERNEL_OK")
</pallas_src>

<mosaic_0001>
module attributes {stable_mosaic.version = 11 : i64} {
  func.func @kernel(%arg0: i32, %arg1: memref<16x32xbf16, #tpu.memory_space<vmem>>, %arg2: memref<16x32xbf16, #tpu.memory_space<vmem>>, %arg3: memref<16x32xbf16, #tpu.memory_space<vmem>>, %arg4: memref<3x32x128xbf16, #tpu.memory_space<vmem>>, %arg5: memref<16x128xf32, #tpu.memory_space<vmem>>) attributes {dimension_semantics = [#tpu.dimension_semantics<parallel>], iteration_bounds = array<i64: 1>, scalar_prefetch = 0 : i64, scratch_operands = 0 : i64, tpu.core_type = #tpu.core_type<tc>, window_params = [{transform_indices = @transform_0, window_bounds = array<i64: 16, 32>}, {transform_indices = @transform_1, window_bounds = array<i64: 16, 32>}, {transform_indices = @transform_2, window_bounds = array<i64: 16, 32>}, {pipeline_mode = #tpu.pipeline_mode<synchronous>, transform_indices = @transform_3, window_bounds = array<i64: 3, 32, 128>}, {transform_indices = @transform_4, window_bounds = array<i64: 16, 128>}]} {
    %c0 = arith.constant 0 : index
    %c0_0 = arith.constant 0 : index
    %0 = vector.load %arg1[%c0, %c0_0] : memref<16x32xbf16, #tpu.memory_space<vmem>>, vector<16x32xbf16>
    %c0_1 = arith.constant 0 : index
    %c0_2 = arith.constant 0 : index
    %c0_3 = arith.constant 0 : index
    %1 = vector.load %arg4[%c0_1, %c0_2, %c0_3] : memref<3x32x128xbf16, #tpu.memory_space<vmem>>, vector<1x32x128xbf16>
    %2 = vector.shape_cast %1 : vector<1x32x128xbf16> to vector<32x128xbf16>
    %cst = arith.constant dense<0.000000e+00> : vector<16x128xf32>
    %3 = tpu.matmul %0, %2, %cst {dimension_numbers = #tpu.dot_dimension_numbers<[1], [0], [0], [1], [0, 0, 1, 1], [], []>} : vector<16x32xbf16>, vector<32x128xbf16>, vector<16x128xf32> -> vector<16x128xf32>
    %c0_4 = arith.constant 0 : index
    %c0_5 = arith.constant 0 : index
    %4 = vector.load %arg2[%c0_4, %c0_5] : memref<16x32xbf16, #tpu.memory_space<vmem>>, vector<16x32xbf16>
    %c1 = arith.constant 1 : index
    %c0_6 = arith.constant 0 : index
    %c0_7 = arith.constant 0 : index
    %5 = vector.load %arg4[%c1, %c0_6, %c0_7] : memref<3x32x128xbf16, #tpu.memory_space<vmem>>, vector<1x32x128xbf16>
    %6 = vector.shape_cast %5 : vector<1x32x128xbf16> to vector<32x128xbf16>
    %cst_8 = arith.constant dense<0.000000e+00> : vector<16x128xf32>
    %7 = tpu.matmul %4, %6, %cst_8 {dimension_numbers = #tpu.dot_dimension_numbers<[1], [0], [0], [1], [0, 0, 1, 1], [], []>} : vector<16x32xbf16>, vector<32x128xbf16>, vector<16x128xf32> -> vector<16x128xf32>
    %8 = arith.addf %3, %7 : vector<16x128xf32>
    %c0_9 = arith.constant 0 : index
    %c0_10 = arith.constant 0 : index
    %9 = vector.load %arg3[%c0_9, %c0_10] : memref<16x32xbf16, #tpu.memory_space<vmem>>, vector<16x32xbf16>
    %c2 = arith.constant 2 : index
    %c0_11 = arith.constant 0 : index
    %c0_12 = arith.constant 0 : index
    %10 = vector.load %arg4[%c2, %c0_11, %c0_12] : memref<3x32x128xbf16, #tpu.memory_space<vmem>>, vector<1x32x128xbf16>
    %11 = vector.shape_cast %10 : vector<1x32x128xbf16> to vector<32x128xbf16>
    %cst_13 = arith.constant dense<0.000000e+00> : vector<16x128xf32>
    %12 = tpu.matmul %9, %11, %cst_13 {dimension_numbers = #tpu.dot_dimension_numbers<[1], [0], [0], [1], [0, 0, 1, 1], [], []>} : vector<16x32xbf16>, vector<32x128xbf16>, vector<16x128xf32> -> vector<16x128xf32>
    %13 = arith.addf %8, %12 : vector<16x128xf32>
    %c0_14 = arith.constant 0 : index
    %c0_15 = arith.constant 0 : index
    %14 = vector.load %arg5[%c0_14, %c0_15] : memref<16x128xf32, #tpu.memory_space<vmem>>, vector<16x128xf32>
    tpu.vector_store %arg5[%c0_14, %c0_15], %13 {strides = array<i32>} : memref<16x128xf32, #tpu.memory_space<vmem>>, vector<16x128xf32>,
    return
  }
  func.func @transform_0(%arg0: i32) -> (i32, i32) {
    %c0_i32 = arith.constant 0 : i32
    %c0_i32_0 = arith.constant 0 : i32
    return %arg0, %c0_i32 : i32, i32
  }
  func.func @transform_1(%arg0: i32) -> (i32, i32) {
    %c0_i32 = arith.constant 0 : i32
    %c0_i32_0 = arith.constant 0 : i32
    return %arg0, %c0_i32 : i32, i32
  }
  func.func @transform_2(%arg0: i32) -> (i32, i32) {
    %c0_i32 = arith.constant 0 : i32
    %c0_i32_0 = arith.constant 0 : i32
    return %arg0, %c0_i32 : i32, i32
  }
  func.func @transform_3(%arg0: i32) -> (i32, i32, i32) {
    %c0_i32 = arith.constant 0 : i32
    %c0_i32_0 = arith.constant 0 : i32
    %c0_i32_1 = arith.constant 0 : i32
    %c0_i32_2 = arith.constant 0 : i32
    return %c0_i32, %c0_i32_0, %c0_i32_1 : i32, i32, i32
  }
  func.func @transform_4(%arg0: i32) -> (i32, i32) {
    %c0_i32 = arith.constant 0 : i32
    %c0_i32_0 = arith.constant 0 : i32
    return %arg0, %c0_i32 : i32, i32
  }
}

</mosaic_0001>

<llo_original>
// kernel: fractal_layer_forward.1
$region0: #{fractal_layer_forward.1}
  #allocation0 [shape = 'u32[]', space=smem, size = 0x4, offset = 0x4, fixed_abs, tag = 'smem constant byte address 0x4 - core index']
  #allocation1 [shape = 'u32[144,128]{1,0:T(1,128)}', space=vmem, size = 0x12000, scoped, tag = 'internal scratch']
  %s0 = inlined_call_operand.vmem [shape: bf16[16,32], index: 0, kind: input, shape index: {}]
  %s1 = inlined_call_operand.vmem [shape: bf16[16,32], index: 1, kind: input, shape index: {}]
  %s2 = inlined_call_operand.vmem [shape: bf16[16,32], index: 2, kind: input, shape index: {}]
  %s3 = inlined_call_operand.vmem [shape: bf16[3,32,128], index: 3, kind: input, shape index: {}]
  %s4 = inlined_call_operand.hbm [shape: f32[16,128], index: 4, kind: output, shape index: {}]
  %s5 = sld [smem:[#allocation0]]
  $region26: #{fractal_layer_forward.1} parent=0
    _
  %s7 = ssub.s32 1, %s5
  %s8 = scalar_select 0, %s7, %s5
  $region1: #{fractal_layer_forward.1} parent=0
    #allocation2 [shape = 'u8[8192]{0}', space=vmem, size = 0x2000, scoped, tag = 'output window, operand 0, single buffered']
    #allocation3 [shape = 's32[1]{0}', space=sflag, size = 0x4, scoped, tag = 'scoped memory for fractal_layer_forward.1']
    %9 = vsyncpa [#allocation3], 0
    // Predicated region
    $region2: #{fractal_layer_forward.1} parent=1 // pred_check
      _
    $region3: #{fractal_layer_forward.1} parent=1 // pred_check_branch
      %11 = sbr.rel (0) target = $region5
    $region4: #{fractal_layer_forward.1} parent=1 // pred_region
      _
    $region5: #{fractal_layer_forward.1} parent=1 // pred_fallthru
      _
    // Predicated region
    $region6: #{fractal_layer_forward.1} parent=1 // pred_check
      _
    $region7: #{fractal_layer_forward.1} parent=1 // pred_check_branch
      %13 = sbr.rel (0) target = $region9
    $region8: #{fractal_layer_forward.1} parent=1 // pred_region
      _
    $region9: #{fractal_layer_forward.1} parent=1 // pred_fallthru
      _
    // Predicated region
    $region10: #{fractal_layer_forward.1} parent=1 // pred_check
      _
    $region11: #{fractal_layer_forward.1} parent=1 // pred_check_branch
      %15 = sbr.rel (0) target = $region13
    $region12: #{fractal_layer_forward.1} parent=1 // pred_region
      _
    $region13: #{fractal_layer_forward.1} parent=1 // pred_fallthru
      _
    // Predicated region
    $region14: #{fractal_layer_forward.1} parent=1 // pred_check
      _
    $region15: #{fractal_layer_forward.1} parent=1 // pred_check_branch
      %17 = sbr.rel (0) target = $region17
    $region16: #{fractal_layer_forward.1} parent=1 // pred_region
      _
    $region17: #{fractal_layer_forward.1} parent=1 // pred_fallthru
      _
    %v19 = vld [vmem:[%s0] sm:$0xf]
    %v20 = vld [vmem:[%s0 + $0x4] sm:$0xf]
    %v21 = vld [vmem:[%s3] sm:$0xf]
    %v22 = vld [vmem:[%s3 + $0x4] sm:$0xf]
    %v23 = vld [vmem:[%s3 + $0x8] sm:$0xf]
    %v24 = vld [vmem:[%s3 + $0xc] sm:$0xf]
    %v25 = vld [vmem:[%s1] sm:$0xf]
    %v26 = vld [vmem:[%s1 + $0x4] sm:$0xf]
    %s27 = scalar_lea.vmem %s3, 16
    %v28 = vld [vmem:[%s27] sm:$0xf]
    %v29 = vld [vmem:[%s27 + $0x4] sm:$0xf]
    %v30 = vld [vmem:[%s27 + $0x8] sm:$0xf]
    %v31 = vld [vmem:[%s27 + $0xc] sm:$0xf]
    %v34 = vunpack.c.l.b16 %v25
    %v35 = vunpack.c.l.b16 %v26
    %v36 = vpack.c.b16 %v35, %v34
    %v41 = vunpack.c.l.b16 %v28
    %v42 = vunpack.c.l.b16 %v29
    %v43 = vunpack.c.l.b16 %v30
    %v44 = vunpack.c.l.b16 %v31
    %v45 = vpack.c.b16 %v42, %v41
    %v46 = vpack.c.b16 %v44, %v43
    %vm49 = vcmask 261120
    %v51 = vsel %vm49, %v36, 0
    %53 = vmatprep.subr.bf16.mxu0 0
    %54 = vmatpush1.bf16.msra.mxu0 %v45
    %55 = vmatprep.subr.bf16.mxu0 0
    %56 = vmatpush1.bf16.msra.mxu0 %v46
    %57 = vmatprep.subr.bf16.mxu0 0
    %58 = vmatpush1.bf16.msra.mxu0 0
    %59 = vmatprep.subr.bf16.mxu0 0
    %60 = vmatpush1.bf16.msra.mxu0 0
    %61 = vmatprep.subr.bf16.mxu0 0
    %62 = vmatpush1.bf16.msra.mxu0 0
    %63 = vmatprep.subr.bf16.mxu0 0
    %64 = vmatpush1.bf16.msra.mxu0 0
    %65 = vmatprep.subr.bf16.mxu0 0
    %66 = vmatpush1.bf16.msra.mxu0 0
    %67 = vmatprep.subr.bf16.mxu0 0
    %68 = vmatpush1.bf16.msra.mxu0 0
    %69 = vmatprep.subr.bf16.mxu0 0
    %70 = vmatpush1.bf16.msra.mxu0 0
    %71 = vmatprep.subr.bf16.mxu0 0
    %72 = vmatpush1.bf16.msra.mxu0 0
    %73 = vmatprep.subr.bf16.mxu0 0
    %74 = vmatpush1.bf16.msra.mxu0 0
    %75 = vmatprep.subr.bf16.mxu0 0
    %76 = vmatpush1.bf16.msra.mxu0 0
    %77 = vmatprep.subr.bf16.mxu0 0
    %78 = vmatpush1.bf16.msra.mxu0 0
    %79 = vmatprep.subr.bf16.mxu0 0
    %80 = vmatpush1.bf16.msra.mxu0 0
    %81 = vmatprep.subr.bf16.mxu0 0
    %82 = vmatpush1.bf16.msra.mxu0 0
    %83 = vmatprep.subr.bf16.mxu0 0
    %84 = vmatpush1.bf16.msra.mxu0 0
    %85 = vmatprep.mubr.bf16.mxu0 0
    %86 = vmatmul.mubr.bf16.gmra.mrb[0].mxu0 %v51
    %v87 = vpop.f32.mrb[0].mxu0
    %v88 = vadd.f32 0.0, %v87
    %v89 = vpop.f32.mrb[0].mxu0
    %v90 = vpop.f32.mrb[0].mxu0
    %v91 = vadd.f32 0.0, %v90
    %v92 = vpop.f32.mrb[0].mxu0
    %93 = vdwg.mxu0
    %v96 = vunpack.c.l.b16 %v19
    %v97 = vunpack.c.l.b16 %v20
    %v98 = vpack.c.b16 %v97, %v96
    %v103 = vunpack.c.l.b16 %v21
    %v104 = vunpack.c.l.b16 %v22
    %v105 = vunpack.c.l.b16 %v23
    %v106 = vunpack.c.l.b16 %v24
    %v107 = vpack.c.b16 %v104, %v103
    %v108 = vpack.c.b16 %v106, %v105
    %v112 = vsel %vm49, %v98, 0
    %114 = vmatprep.subr.bf16.mxu0 0
    %115 = vmatpush1.bf16.msra.mxu0 %v107
    %116 = vmatprep.subr.bf16.mxu0 0
    %117 = vmatpush1.bf16.msra.mxu0 %v108
    %118 = vmatprep.subr.bf16.mxu0 0
    %119 = vmatpush1.bf16.msra.mxu0 0
    %120 = vmatprep.subr.bf16.mxu0 0
    %121 = vmatpush1.bf16.msra.mxu0 0
    %122 = vmatprep.subr.bf16.mxu0 0
    %123 = vmatpush1.bf16.msra.mxu0 0
    %124 = vmatprep.subr.bf16.mxu0 0
    %125 = vmatpush1.bf16.msra.mxu0 0
    %126 = vmatprep.subr.bf16.mxu0 0
    %127 = vmatpush1.bf16.msra.mxu0 0
    %128 = vmatprep.subr.bf16.mxu0 0
    %129 = vmatpush1.bf16.msra.mxu0 0
    %130 = vmatprep.subr.bf16.mxu0 0
    %131 = vmatpush1.bf16.msra.mxu0 0
    %132 = vmatprep.subr.bf16.mxu0 0
    %133 = vmatpush1.bf16.msra.mxu0 0
    %134 = vmatprep.subr.bf16.mxu0 0
    %135 = vmatpush1.bf16.msra.mxu0 0
    %136 = vmatprep.subr.bf16.mxu0 0
    %137 = vmatpush1.bf16.msra.mxu0 0
    %138 = vmatprep.subr.bf16.mxu0 0
    %139 = vmatpush1.bf16.msra.mxu0 0
    %140 = vmatprep.subr.bf16.mxu0 0
    %141 = vmatpush1.bf16.msra.mxu0 0
    %142 = vmatprep.subr.bf16.mxu0 0
    %143 = vmatpush1.bf16.msra.mxu0 0
    %144 = vmatprep.subr.bf16.mxu0 0
    %145 = vmatpush1.bf16.msra.mxu0 0
    %146 = vmatprep.mubr.bf16.mxu0 0
    %147 = vmatmul.mubr.bf16.gmra.mrb[0].mxu0 %v112
    %v148 = vpop.f32.mrb[0].mxu0
    %v149 = vadd.f32 %v88, %v148
    %v150 = vpop.f32.mrb[0].mxu0
    %v151 = vpop.f32.mrb[0].mxu0
    %v152 = vadd.f32 %v91, %v151
    %v153 = vpop.f32.mrb[0].mxu0
    %154 = vdwg.mxu0
    %v155 = vld [vmem:[%s2] sm:$0xf]
    %v156 = vld [vmem:[%s2 + $0x4] sm:$0xf]
    %s157 = scalar_lea.vmem %s3, 32
    %v158 = vld [vmem:[%s157] sm:$0xf]
    %v159 = vld [vmem:[%s157 + $0x4] sm:$0xf]
    %v160 = vld [vmem:[%s157 + $0x8] sm:$0xf]
    %v161 = vld [vmem:[%s157 + $0xc] sm:$0xf]
    %v164 = vunpack.c.l.b16 %v155
    %v165 = vunpack.c.l.b16 %v156
    %v166 = vpack.c.b16 %v165, %v164
    %v171 = vunpack.c.l.b16 %v158
    %v172 = vunpack.c.l.b16 %v159
    %v173 = vunpack.c.l.b16 %v160
    %v174 = vunpack.c.l.b16 %v161
    %v175 = vpack.c.b16 %v172, %v171
    %v176 = vpack.c.b16 %v174, %v173
    %v180 = vsel %vm49, %v166, 0
    %182 = vmatprep.subr.bf16.mxu0 0
    %183 = vmatpush1.bf16.msra.mxu0 %v175
    %184 = vmatprep.subr.bf16.mxu0 0
    %185 = vmatpush1.bf16.msra.mxu0 %v176
    %186 = vmatprep.subr.bf16.mxu0 0
    %187 = vmatpush1.bf16.msra.mxu0 0
    %188 = vmatprep.subr.bf16.mxu0 0
    %189 = vmatpush1.bf16.msra.mxu0 0
    %190 = vmatprep.subr.bf16.mxu0 0
    %191 = vmatpush1.bf16.msra.mxu0 0
    %192 = vmatprep.subr.bf16.mxu0 0
    %193 = vmatpush1.bf16.msra.mxu0 0
    %194 = vmatprep.subr.bf16.mxu0 0
    %195 = vmatpush1.bf16.msra.mxu0 0
    %196 = vmatprep.subr.bf16.mxu0 0
    %197 = vmatpush1.bf16.msra.mxu0 0
    %198 = vmatprep.subr.bf16.mxu0 0
    %199 = vmatpush1.bf16.msra.mxu0 0
    %200 = vmatprep.subr.bf16.mxu0 0
    %201 = vmatpush1.bf16.msra.mxu0 0
    %202 = vmatprep.subr.bf16.mxu0 0
    %203 = vmatpush1.bf16.msra.mxu0 0
    %204 = vmatprep.subr.bf16.mxu0 0
    %205 = vmatpush1.bf16.msra.mxu0 0
    %206 = vmatprep.subr.bf16.mxu0 0
    %207 = vmatpush1.bf16.msra.mxu0 0
    %208 = vmatprep.subr.bf16.mxu0 0
    %209 = vmatpush1.bf16.msra.mxu0 0
    %210 = vmatprep.subr.bf16.mxu0 0
    %211 = vmatpush1.bf16.msra.mxu0 0
    %212 = vmatprep.subr.bf16.mxu0 0
    %213 = vmatpush1.bf16.msra.mxu0 0
    %214 = vmatprep.mubr.bf16.mxu0 0
    %215 = vmatmul.mubr.bf16.gmra.mrb[0].mxu0 %v180
    %v216 = vpop.f32.mrb[0].mxu0
    %v217 = vadd.f32 0.0, %v216
    %v218 = vpop.f32.mrb[0].mxu0
    %v219 = vpop.f32.mrb[0].mxu0
    %v220 = vadd.f32 0.0, %v219
    %v221 = vpop.f32.mrb[0].mxu0
    %222 = vdwg.mxu0
    %v223 = vadd.f32 %v149, %v217
    %v224 = vadd.f32 %v152, %v220
    %225 = vst [vmem:[#allocation2] sm:$0xff] %v223
    %226 = vst [vmem:[#allocation2 + $0x8] sm:$0xff] %v224
    // Predicated region
    $region18: #{fractal_layer_forward.1} parent=1 // pred_check
      _
    $region19: #{fractal_layer_forward.1} parent=1 // pred_check_branch
      %228 = sbr.rel (0) target = $region21
    $region20: #{fractal_layer_forward.1} parent=1 // pred_region
      %s230 = ssub.s32 256, 256
      %231 = vsyncadd [#allocation3], %s230
      %s232 = sshll.u32 [#allocation2], 4
      %s233 = int_to_ptr.vmem [resolvable:$true] %s232
      %238 = dma.vmem_to_hbm [thread:$0]  %s233, 256, %s4, [#allocation3], 128, 128, 8
    $region21: #{fractal_layer_forward.1} parent=1 // pred_fallthru
      _
    // Predicated region
    $region22: #{fractal_layer_forward.1} parent=1 // pred_check
      _
    $region23: #{fractal_layer_forward.1} parent=1 // pred_check_branch
      %240 = sbr.rel (0) target = $region25
    $region24: #{fractal_layer_forward.1} parent=1 // pred_region
      %241 = dma.done [#allocation3], 256
    $region25: #{fractal_layer_forward.1} parent=1 // pred_fallthru
      _
    %242 = vsyncpa [#allocation3], 1

</llo_original>
